<compile_context>
chip_gen: v7x
topology: tpu7x:2x2x1
jax: 0.10.0
libtpu: 0.0.40
codegen_flags: <defaults>
</compile_context>

<pallas_src>
import functools

import jax
import jax.numpy as jnp
from jax.experimental import pallas as pl
from jax.experimental.pallas import tpu as pltpu


_NEG_SLOPE = 0.2            # negative_slope_in_norm
_MASK = -1e30               # f32-safe mask constant (softmax path stays in f32)
_VMEM_LIMIT = 48 * 1024 * 1024   # explicit scoped-VMEM budget (fits v7x's 64 MiB)


def _leaky_relu(x, slope=_NEG_SLOPE):
    return jnp.where(x > 0, x, slope * x)


def _bf16(x):
    return x.astype(jnp.bfloat16)


def _row_tile(n, max_t=256):
    # Largest power-of-two tile <= max_t that divides n; fall back to a full block.
    for t in (256, 128, 64, 32, 16, 8):
        if t <= max_t and n % t == 0:
            return t
    return n


# ----------------------------------------------------------------------------
# Pallas kernels
# ----------------------------------------------------------------------------

def projection_kernel(x_ref, w_ref, b_ref, o_ref):
    # project_layers: Linear(input_dim -> h_dim) + LeakyReLU.
    # (BatchNorm with fresh running stats / affine=False and p_drop=0 is identity.)
    # TODO(synk): K=input_dim is tiny (<128) -> poor MXU column utilization; acceptable
    #             as a fixed per-forward cost, could be padded/fused into XLA instead.
    h = jnp.dot(_bf16(x_ref[...]), _bf16(w_ref[...]),
                preferred_element_type=jnp.float32) + b_ref[...]
    o_ref[...] = _leaky_relu(h)


def transform_kernel(h_ref, w_ref, wh_ref):
    # Per-layer hoist: Wh = h_last @ W (all heads at once, 256+-wide MXU output).
    wh_ref[...] = jnp.dot(_bf16(h_ref[...]), _bf16(w_ref[...]),
                          preferred_element_type=jnp.float32)


def transform_kernel_cross(h_ref, w_ref, wc_ref, wh_ref, hwc_ref):
    # Per-layer hoist: Wh = h_last @ W and HWc = h_last @ W_cross (cross-graph message
    # precompute, consumed by the *other* graph's GAT kernel through MM).
    h = _bf16(h_ref[...])
    wh_ref[...] = jnp.dot(h, _bf16(w_ref[...]), preferred_element_type=jnp.float32)
    hwc_ref[...] = jnp.dot(h, _bf16(wc_ref[...]), preferred_element_type=jnp.float32)


def matching_kernel(hda_ref, hq_ref, mask_ref, mm_ref, *, tau):
    # MatchingMatrix: dot-product similarity + masked softmax over the q axis.
    mask = mask_ref[...]
    # trans_b matmul via dot_general: no explicit transpose of h_q.
    s = jax.lax.dot_general(_bf16(hda_ref[...]), _bf16(hq_ref[...]),
                            (((1,), (1,)), ((), ())),
                            preferred_element_type=jnp.float32) * (1.0 / tau)
    s = jnp.where(mask > 0, s, _MASK)
    m = jnp.max(s, axis=-1, keepdims=True)
    p = jnp.exp(s - m)
    mm = p * pl.reciprocal(jnp.sum(p, axis=-1, keepdims=True), approx=True)
    # Rows with no valid match get all-zero probabilities instead of a uniform row.
    row_valid = jnp.sum(mask, axis=-1, keepdims=True) > 0
    mm_ref[...] = jnp.where(row_valid, mm, 0.0)


def _gat_body(el_ref, er_ref, bias_ref, wh_ref, hres_ref, h0_ref, b_ref, o_ref,
              mm_ref, hwc_ref, residual):
    # One (head, destination-row tile) grid point. All head-invariant / tile-invariant
    # matmuls (Wh, H_other@W_cross, el, er, wa) were hoisted out per layer.
    el = el_ref[0]                                   # (T, 1)  this head, this dst tile
    er = er_ref[0]                                   # (1, N)  this head, all src nodes
    bias = bias_ref[...].astype(jnp.float32)         # (T, N)  additive -1e30 adj mask

    # Masked softmax over source nodes (f32 path).
    e = _leaky_relu(el + er) + bias
    m = jnp.max(e, axis=-1, keepdims=True)
    p = jnp.exp(e - m)
    alpha = p * pl.reciprocal(jnp.sum(p, axis=-1, keepdims=True), approx=True)
    # Destination rows with no in-edge aggregate to zero instead of a uniform row.
    row_valid = jnp.max(bias, axis=-1, keepdims=True) > -1.0
    alpha = jnp.where(row_valid, alpha, 0.0)

    # Aggregation over the hoisted per-head Wh columns (bf16 operands, f32 accumulate).
    out = jnp.dot(_bf16(alpha), _bf16(wh_ref[...]),
                  preferred_element_type=jnp.float32)                       # (T, dh)

    if mm_ref is not None:
        # Cross-graph message: MM rows (pre-cast bf16, pre-transposed on the q side)
        # times the hoisted per-head H_other @ W_cross columns.
        out = out + jnp.dot(mm_ref[...], _bf16(hwc_ref[...]),
                            preferred_element_type=jnp.float32)             # (T, dh)

    out = _leaky_relu(out + b_ref[...])
    if residual:
        # residual on previous layer + initial-feature residual (h_*_0 argument)
        out = out + hres_ref[...] + h0_ref[...]
    o_ref[...] = out


def make_gat_kernel(*, has_cross, residual):
    if has_cross:
        def kernel(el_ref, er_ref, bias_ref, wh_ref, hres_ref, h0_ref,
                   mm_ref, hwc_ref, b_ref, o_ref):
            _gat_body(el_ref, er_ref, bias_ref, wh_ref, hres_ref, h0_ref, b_ref, o_ref,
                      mm_ref=mm_ref, hwc_ref=hwc_ref, residual=residual)
    else:
        def kernel(el_ref, er_ref, bias_ref, wh_ref, hres_ref, h0_ref, b_ref, o_ref):
            _gat_body(el_ref, er_ref, bias_ref, wh_ref, hres_ref, h0_ref, b_ref, o_ref,
                      mm_ref=None, hwc_ref=None, residual=residual)
    return kernel


# ----------------------------------------------------------------------------
# pallas_call wrappers
# ----------------------------------------------------------------------------

def _cparams(n_axes):
    return pltpu.CompilerParams(dimension_semantics=("parallel",) * n_axes,
                                vmem_limit_bytes=_VMEM_LIMIT)


def project(x, w, b):
    n, in_dim = x.shape
    h_dim = w.shape[1]
    t = _row_tile(n)
    return pl.pallas_call(
        projection_kernel,
        grid=(n // t,),
        in_specs=[
            pl.BlockSpec((t, in_dim), lambda i: (i, 0)),
            pl.BlockSpec((in_dim, h_dim), lambda i: (0, 0)),
            pl.BlockSpec((1, h_dim), lambda i: (0, 0)),
        ],
        out_specs=pl.BlockSpec((t, h_dim), lambda i: (i, 0)),
        out_shape=jax.ShapeDtypeStruct((n, h_dim), jnp.float32),
        compiler_params=_cparams(1),
    )(x, w, b)


def transform(h, w, w_cross=None):
    """Per-layer hoisted transforms: Wh = h @ W (and HWc = h @ W_cross if needed)."""
    n, h_dim = h.shape
    t = _row_tile(n)
    grid = (n // t,)
    h_spec = pl.BlockSpec((t, h_dim), lambda i: (i, 0))
    w_spec = pl.BlockSpec((h_dim, h_dim), lambda i: (0, 0))
    o_spec = pl.BlockSpec((t, h_dim), lambda i: (i, 0))
    if w_cross is None:
        wh = pl.pallas_call(
            transform_kernel, grid=grid,
            in_specs=[h_spec, w_spec],
            out_specs=o_spec,
            out_shape=jax.ShapeDtypeStruct((n, h_dim), jnp.float32),
            compiler_params=_cparams(1),
        )(h, w)
        return wh, None
    wh, hwc = pl.pallas_call(
        transform_kernel_cross, grid=grid,
        in_specs=[h_spec, w_spec, w_spec],
        out_specs=(o_spec, o_spec),
        out_shape=(jax.ShapeDtypeStruct((n, h_dim), jnp.float32),
                   jax.ShapeDtypeStruct((n, h_dim), jnp.float32)),
        compiler_params=_cparams(1),
    )(h, w, w_cross)
    return wh, hwc


def matching_matrix(h_da, h_q, mask, tau=1.0):
    n_da, h_dim = h_da.shape
    n_q = h_q.shape[0]
    t = _row_tile(n_da)
    return pl.pallas_call(
        functools.partial(matching_kernel, tau=tau),
        grid=(n_da // t,),
        in_specs=[
            pl.BlockSpec((t, h_dim), lambda i: (i, 0)),     # h_da rows (streamed)
            pl.BlockSpec((n_q, h_dim), lambda i: (0, 0)),   # h_q resident (revisited)
            pl.BlockSpec((t, n_q), lambda i: (i, 0)),       # mask rows
        ],
        out_specs=pl.BlockSpec((t, n_q), lambda i: (i, 0)),
        out_shape=jax.ShapeDtypeStruct((n_da, n_q), jnp.float32),
        compiler_params=_cparams(1),
    )(h_da, h_q, mask)


def gat_layer(h_last, h_0, adj_bias, wh, el, er, bias_b, *, num_head,
              residual=True, mm_bf16=None, hwc_other=None):
    """One CPADE_GAT_layer pass for one graph, grid = (heads, dst-row tiles)."""
    n, h_dim = h_last.shape
    dh = h_dim // num_head
    # Lane-dense layout: every per-head output block is (TILE, dh) with dh % 128 == 0.
    # TODO(synk): pad h_dim / head_dim to multiples of 128 for non-aligned configs.
    assert h_dim % num_head == 0 and dh % 128 == 0, \
        "head_dim must be a multiple of 128 (lane-dense layout)"
    t = _row_tile(n)
    # Row tiles are the innermost grid axis, so head-indexed blocks (Wh/HWc columns,
    # er, bias) keep the same block index across it and are not re-DMA'd.
    grid = (num_head, n // t)
    has_cross = mm_bf16 is not None

    in_specs = [
        pl.BlockSpec((1, t, 1), lambda hd, i: (hd, i, 0)),     # el (dst tile, per head)
        pl.BlockSpec((1, 1, n), lambda hd, i: (hd, 0, 0)),     # er (all src, per head)
        pl.BlockSpec((t, n),    lambda hd, i: (i, 0)),         # additive adj bias (bf16)
        pl.BlockSpec((n, dh),   lambda hd, i: (0, hd)),        # hoisted Wh head columns
        pl.BlockSpec((t, dh),   lambda hd, i: (i, hd)),        # residual slice of h_last
        pl.BlockSpec((t, dh),   lambda hd, i: (i, hd)),        # residual slice of h_0
    ]
    args = [el, er, adj_bias, wh, h_last, h_0]

    if has_cross:
        n_oth = hwc_other.shape[0]
        in_specs += [
            pl.BlockSpec((t, n_oth), lambda hd, i: (i, 0)),    # MM rows, bf16 (q side: MM^T)
            pl.BlockSpec((n_oth, dh), lambda hd, i: (0, hd)),  # hoisted H_other@W_cross cols
        ]
        args += [mm_bf16, hwc_other]

    in_specs.append(pl.BlockSpec((1, dh), lambda hd, i: (0, hd)))   # bias slice
    args.append(bias_b)

    kernel = make_gat_kernel(has_cross=has_cross, residual=residual)
    return pl.pallas_call(
        kernel,
        grid=grid,
        in_specs=in_specs,
        out_specs=pl.BlockSpec((t, dh), lambda hd, i: (i, hd)),
        out_shape=jax.ShapeDtypeStruct((n, h_dim), jnp.float32),
        compiler_params=_cparams(2),
    )(*args)


# ----------------------------------------------------------------------------
# CPADE_GAT forward
# ----------------------------------------------------------------------------

def cpade_gat_forward(params, bg_da, bg_q, h_da, h_q, b_mask, Mn, PEid, DEid,
                      *, num_head, residual=True):
    # TODO(synk): Mn and PEid are accepted for signature parity but their role in the
    #             (unshown) CPADE_GAT_layer is unspecified; they are not consumed here.
    del Mn, PEid

    h_da_0 = h_da_next = project(h_da, params["proj_w"], params["proj_b"])
    h_q_0 = h_q_next = project(h_q, params["proj_w"], params["proj_b"])

    # Layer-invariant additive attention masks; bf16 halves adjacency HBM traffic
    # (adjacency is only used as a boolean mask in unweighted GAT).
    bias_da = jnp.where(bg_da > 0, 0.0, _MASK).astype(jnp.bfloat16)
    bias_q = jnp.where(bg_q > 0, 0.0, _MASK).astype(jnp.bfloat16)

    h_dim = h_da_0.shape[1]
    dh = h_dim // num_head

    mm = None
    list_mm, list_negative_de = [], []

    # TODO(synk): the da/q GAT calls below are independent; on v7x they could be split
    #             across the two TensorCores via core_map (needs node padding).
    for lp in params["layers"]:
        need_cross = mm is not None

        # Per-layer hoisted transforms (skip W_cross entirely on layer 0, MM is None).
        wh_da, hwc_da = transform(h_da_next, lp["W"],
                                  lp["W_cross"] if need_cross else None)
        wh_q, hwc_q = transform(h_q_next, lp["W"],
                                lp["W_cross"] if need_cross else None)

        # Tiny per-head attention projections, computed once per layer in plain JAX:
        #   wa_l/wa_r are (h_dim, num_head), el/er are (N, num_head).
        a_l = lp["a_lr"][:, 0, :]                        # (num_head, dh)
        a_r = lp["a_lr"][:, 1, :]
        w_heads = lp["W"].reshape(h_dim, num_head, dh)
        wa_l = jnp.einsum("ihd,hd->ih", w_heads, a_l)    # (h_dim, num_head)
        wa_r = jnp.einsum("ihd,hd->ih", w_heads, a_r)

        def _elr(h):
            el = (h @ wa_l).T[:, :, None]                # (num_head, N, 1)
            er = (h @ wa_r).T[:, None, :]                # (num_head, 1, N)
            return el, er

        el_da, er_da = _elr(h_da_next)
        el_q, er_q = _elr(h_q_next)

        # One bf16 cast + one transpose of MM per layer (instead of per grid point).
        mm_bf = mm.astype(jnp.bfloat16) if need_cross else None
        mm_t_bf = mm_bf.T if need_cross else None

        h_da_new = gat_layer(h_da_next, h_da_0, bias_da, wh_da, el_da, er_da,
                             lp["b"], num_head=num_head, residual=residual,
                             mm_bf16=mm_bf, hwc_other=hwc_q)
        h_q_new = gat_layer(h_q_next, h_q_0, bias_q, wh_q, el_q, er_q,
                            lp["b"], num_head=num_head, residual=residual,
                            mm_bf16=mm_t_bf, hwc_other=hwc_da)
        h_da_next, h_q_next = h_da_new, h_q_new

        # negative_DE: per-negative-pair compatibility score (gather is glue -> plain JAX).
        negative_de = jnp.sum(h_da_next[DEid[:, 0]] * h_q_next[DEid[:, 1]], axis=-1)

        mm = matching_matrix(h_da_next, h_q_next, b_mask, tau=1.0)

        list_negative_de.append(negative_de)
        list_mm.append(mm)

    return mm, h_da_next, h_q_next, list_negative_de, list_mm


# ----------------------------------------------------------------------------
# Deterministic parameter init + demo
# ----------------------------------------------------------------------------

def init_params(key, input_dim, h_dim, num_head, num_layers):
    head_dim = h_dim // num_head
    keys = jax.random.split(key, 2 + 4 * num_layers)
    params = {
        "proj_w": 0.1 * jax.random.normal(keys[0], (input_dim, h_dim), jnp.float32),
        "proj_b": 0.1 * jax.random.normal(keys[1], (1, h_dim), jnp.float32),
        "layers": [],
    }
    for i in range(num_layers):
        k = keys[2 + 4 * i: 2 + 4 * (i + 1)]
        params["layers"].append({
            "W": 0.1 * jax.random.normal(k[0], (h_dim, h_dim), jnp.float32),
            # per-head [a_l, a_r] stacked on axis 1.
            "a_lr": 0.1 * jax.random.normal(k[1], (num_head, 2, head_dim), jnp.float32),
            "W_cross": 0.1 * jax.random.normal(k[2], (h_dim, h_dim), jnp.float32),
            "b": 0.1 * jax.random.normal(k[3], (1, h_dim), jnp.float32),
        })
    return params


def _ring_adjacency(n):
    eye = jnp.eye(n, dtype=jnp.float32)
    ring = jnp.roll(eye, 1, axis=1) + jnp.roll(eye, -1, axis=1)
    return jnp.clip(ring + eye, 0.0, 1.0)  # self loops guarantee non-empty softmax rows


if __name__ == "__main__":
    num_layers = 2
    num_head = 2
    input_dim = 8
    h_dim = 256           # head_dim = 128 -> lane-dense per-head blocks
    n_da, n_q = 256, 128  # da side: one 256-row tile per head; q side: one 128-row tile
    n_neg = 8

    key = jax.random.PRNGKey(0)
    k_par, k_da, k_q, k_neg0, k_neg1 = jax.random.split(key, 5)

    params = init_params(k_par, input_dim, h_dim, num_head, num_layers)

    h_da = jax.random.normal(k_da, (n_da, input_dim), jnp.float32)
    h_q = jax.random.normal(k_q, (n_q, input_dim), jnp.float32)
    bg_da = _ring_adjacency(n_da)
    bg_q = _ring_adjacency(n_q)
    b_mask = jnp.ones((n_da, n_q), jnp.float32)
    Mn = jnp.zeros((n_da, n_q), jnp.float32)
    PEid = jnp.stack([jnp.arange(n_neg, dtype=jnp.int32),
                      jnp.arange(n_neg, dtype=jnp.int32) % n_q], axis=1)
    DEid = jnp.stack([jax.random.randint(k_neg0, (n_neg,), 0, n_da, jnp.int32),
                      jax.random.randint(k_neg1, (n_neg,), 0, n_q, jnp.int32)], axis=1)

    MM, h_da_out, h_q_out, list_neg_de, list_mm = cpade_gat_forward(
        params, bg_da, bg_q, h_da, h_q, b_mask, Mn, PEid, DEid,
        num_head=num_head, residual=True)

    jax.block_until_ready((MM, h_da_out, h_q_out, list_neg_de, list_mm))
    assert MM.shape == (n_da, n_q)
    assert h_da_out.shape == (n_da, h_dim) and h_q_out.shape == (n_q, h_dim)
    assert len(list_mm) == num_layers and len(list_neg_de) == num_layers
    assert bool(jnp.all(jnp.isfinite(MM)))
    assert bool(jnp.all(jnp.isfinite(h_da_out))) and bool(jnp.all(jnp.isfinite(h_q_out)))
    print("KERNEL_OK")
</pallas_src>

<mosaic_0001>
module attributes {stable_mosaic.version = 11 : i64} {
  func.func @projection_kernel(%arg0: i32, %arg1: memref<256x8xf32, #tpu.memory_space<vmem>>, %arg2: memref<8x256xf32, #tpu.memory_space<vmem>>, %arg3: memref<1x256xf32, #tpu.memory_space<vmem>>, %arg4: memref<256x256xf32, #tpu.memory_space<vmem>>) attributes {dimension_semantics = [#tpu.dimension_semantics<parallel>], iteration_bounds = array<i64: 1>, scalar_prefetch = 0 : i64, scratch_operands = 0 : i64, tpu.core_type = #tpu.core_type<tc>, window_params = [{transform_indices = @transform_0, window_bounds = array<i64: 256, 8>}, {pipeline_mode = #tpu.pipeline_mode<synchronous>, transform_indices = @transform_1, window_bounds = array<i64: 8, 256>}, {pipeline_mode = #tpu.pipeline_mode<synchronous>, transform_indices = @transform_2, window_bounds = array<i64: 1, 256>}, {transform_indices = @transform_3, window_bounds = array<i64: 256, 256>}]} {
    %c0 = arith.constant 0 : index
    %c0_0 = arith.constant 0 : index
    %0 = vector.load %arg1[%c0, %c0_0] : memref<256x8xf32, #tpu.memory_space<vmem>>, vector<256x8xf32>
    %1 = arith.truncf %0 : vector<256x8xf32> to vector<256x8xbf16>
    %c0_1 = arith.constant 0 : index
    %c0_2 = arith.constant 0 : index
    %2 = vector.load %arg2[%c0_1, %c0_2] : memref<8x256xf32, #tpu.memory_space<vmem>>, vector<8x256xf32>
    %3 = arith.truncf %2 : vector<8x256xf32> to vector<8x256xbf16>
    %cst = arith.constant dense<0.000000e+00> : vector<256x256xf32>
    %4 = tpu.matmul %1, %3, %cst {dimension_numbers = #tpu.dot_dimension_numbers<[1], [0], [0], [1], [0, 0, 1, 1], [], []>} : vector<256x8xbf16>, vector<8x256xbf16>, vector<256x256xf32> -> vector<256x256xf32>
    %c0_3 = arith.constant 0 : index
    %c0_4 = arith.constant 0 : index
    %5 = vector.load %arg3[%c0_3, %c0_4] : memref<1x256xf32, #tpu.memory_space<vmem>>, vector<1x256xf32>
    %6 = vector.broadcast %5 : vector<1x256xf32> to vector<256x256xf32>
    %7 = arith.addf %4, %6 : vector<256x256xf32>
    %cst_5 = arith.constant 0.000000e+00 : f32
    %8 = vector.broadcast %cst_5 : f32 to vector<256x256xf32>
    %9 = arith.cmpf ogt, %7, %8 : vector<256x256xf32>
    %cst_6 = arith.constant 2.000000e-01 : f32
    %10 = vector.broadcast %cst_6 : f32 to vector<256x256xf32>
    %11 = arith.mulf %10, %7 : vector<256x256xf32>
    %12 = arith.select %9, %7, %11 : vector<256x256xi1>, vector<256x256xf32>
    %c0_7 = arith.constant 0 : index
    %c0_8 = arith.constant 0 : index
    %13 = vector.load %arg4[%c0_7, %c0_8] : memref<256x256xf32, #tpu.memory_space<vmem>>, vector<256x256xf32>
    tpu.vector_store %arg4[%c0_7, %c0_8], %12 {strides = array<i32>} : memref<256x256xf32, #tpu.memory_space<vmem>>, vector<256x256xf32>,
    return
  }
  func.func @transform_0(%arg0: i32) -> (i32, i32) {
    %c0_i32 = arith.constant 0 : i32
    %c0_i32_0 = arith.constant 0 : i32
    return %arg0, %c0_i32 : i32, i32
  }
  func.func @transform_1(%arg0: i32) -> (i32, i32) {
    %c0_i32 = arith.constant 0 : i32
    %c0_i32_0 = arith.constant 0 : i32
    %c0_i32_1 = arith.constant 0 : i32
    return %c0_i32, %c0_i32_0 : i32, i32
  }
  func.func @transform_2(%arg0: i32) -> (i32, i32) {
    %c0_i32 = arith.constant 0 : i32
    %c0_i32_0 = arith.constant 0 : i32
    %c0_i32_1 = arith.constant 0 : i32
    return %c0_i32, %c0_i32_0 : i32, i32
  }
  func.func @transform_3(%arg0: i32) -> (i32, i32) {
    %c0_i32 = arith.constant 0 : i32
    %c0_i32_0 = arith.constant 0 : i32
    return %arg0, %c0_i32 : i32, i32
  }
}

</mosaic_0001>

<llo_original>
// kernel: tpu_custom_call.1
$region0: #{tpu_custom_call.1}
  #allocation0 [shape = 'u32[]', space=smem, size = 0x4, offset = 0x4, fixed_abs, tag = 'smem constant byte address 0x4 - core index']
  #allocation1 [shape = 'u32[144,128]{1,0:T(1,128)}', space=vmem, size = 0x12000, scoped, tag = 'internal scratch']
  %s0 = inlined_call_operand.vmem [shape: f32[256,8], index: 0, kind: input, shape index: {}]
  %s1 = inlined_call_operand.vmem [shape: f32[8,256], index: 1, kind: input, shape index: {}]
  %s2 = inlined_call_operand.vmem [shape: f32[1,256], index: 2, kind: input, shape index: {}]
  %s3 = inlined_call_operand.hbm [shape: f32[256,256], index: 3, kind: output, shape index: {}]
  %s4 = sld [smem:[#allocation0]]
  $region22: #{tpu_custom_call.1} parent=0
    _
  %s6 = ssub.s32 1, %s4
  %s7 = scalar_select 0, %s6, %s4
  $region1: #{tpu_custom_call.1} parent=0
    #allocation2 [shape = 'u8[262144]{0}', space=vmem, size = 0x40000, scoped, tag = 'output window, operand 0, single buffered']
    #allocation3 [shape = 's32[1]{0}', space=sflag, size = 0x4, scoped, tag = 'scoped memory for tpu_custom_call.1']
    %8 = vsyncpa [#allocation3], 0
    // Predicated region
    $region2: #{tpu_custom_call.1} parent=1 // pred_check
      _
    $region3: #{tpu_custom_call.1} parent=1 // pred_check_branch
      %10 = sbr.rel (0) target = $region5
    $region4: #{tpu_custom_call.1} parent=1 // pred_region
      _
    $region5: #{tpu_custom_call.1} parent=1 // pred_fallthru
      _
    // Predicated region
    $region6: #{tpu_custom_call.1} parent=1 // pred_check
      _
    $region7: #{tpu_custom_call.1} parent=1 // pred_check_branch
      %12 = sbr.rel (0) target = $region9
    $region8: #{tpu_custom_call.1} parent=1 // pred_region
      _
    $region9: #{tpu_custom_call.1} parent=1 // pred_fallthru
      _
    // Predicated region
    $region10: #{tpu_custom_call.1} parent=1 // pred_check
      _
    $region11: #{tpu_custom_call.1} parent=1 // pred_check_branch
      %14 = sbr.rel (0) target = $region13
    $region12: #{tpu_custom_call.1} parent=1 // pred_region
      _
    $region13: #{tpu_custom_call.1} parent=1 // pred_fallthru
      _
    %v16 = vld [vmem:[%s0] sm:$0xff]
    %v17 = vld [vmem:[%s0 + $0x8] sm:$0xff]
    %v18 = vld [vmem:[%s0 + $0x10] sm:$0xff]
    %v19 = vld [vmem:[%s0 + $0x18] sm:$0xff]
    %v20 = vld [vmem:[%s0 + $0x20] sm:$0xff]
    %v21 = vld [vmem:[%s0 + $0x28] sm:$0xff]
    %v22 = vld [vmem:[%s0 + $0x30] sm:$0xff]
    %v23 = vld [vmem:[%s0 + $0x38] sm:$0xff]
    %v24 = vld [vmem:[%s0 + $0x40] sm:$0xff]
    %v25 = vld [vmem:[%s0 + $0x48] sm:$0xff]
    %v26 = vld [vmem:[%s0 + $0x50] sm:$0xff]
    %v27 = vld [vmem:[%s0 + $0x58] sm:$0xff]
    %v28 = vld [vmem:[%s0 + $0x60] sm:$0xff]
    %v29 = vld [vmem:[%s0 + $0x68] sm:$0xff]
    %v30 = vld [vmem:[%s0 + $0x70] sm:$0xff]
    %v31 = vld [vmem:[%s0 + $0x78] sm:$0xff]
    %v32 = vld [vmem:[%s0 + $0x80] sm:$0xff]
    %v33 = vld [vmem:[%s0 + $0x88] sm:$0xff]
    %v34 = vld [vmem:[%s0 + $0x90] sm:$0xff]
    %v35 = vld [vmem:[%s0 + $0x98] sm:$0xff]
    %v36 = vld [vmem:[%s0 + $0xa0] sm:$0xff]
    %v37 = vld [vmem:[%s0 + $0xa8] sm:$0xff]
    %v38 = vld [vmem:[%s0 + $0xb0] sm:$0xff]
    %v39 = vld [vmem:[%s0 + $0xb8] sm:$0xff]
    %v40 = vld [vmem:[%s0 + $0xc0] sm:$0xff]
    %v41 = vld [vmem:[%s0 + $0xc8] sm:$0xff]
    %v42 = vld [vmem:[%s0 + $0xd0] sm:$0xff]
    %v43 = vld [vmem:[%s0 + $0xd8] sm:$0xff]
    %v44 = vld [vmem:[%s0 + $0xe0] sm:$0xff]
    %v45 = vld [vmem:[%s0 + $0xe8] sm:$0xff]
    %v46 = vld [vmem:[%s0 + $0xf0] sm:$0xff]
    %v47 = vld [vmem:[%s0 + $0xf8] sm:$0xff]
    %v48 = vpack.c.bf16 %v17, %v16
    %v49 = vpack.c.bf16 %v19, %v18
    %v50 = vpack.c.bf16 %v21, %v20
    %v51 = vpack.c.bf16 %v23, %v22
    %v52 = vpack.c.bf16 %v25, %v24
    %v53 = vpack.c.bf16 %v27, %v26
    %v54 = vpack.c.bf16 %v29, %v28
    %v55 = vpack.c.bf16 %v31, %v30
    %v56 = vpack.c.bf16 %v33, %v32
    %v57 = vpack.c.bf16 %v35, %v34
    %v58 = vpack.c.bf16 %v37, %v36
    %v59 = vpack.c.bf16 %v39, %v38
    %v60 = vpack.c.bf16 %v41, %v40
    %v61 = vpack.c.bf16 %v43, %v42
    %v62 = vpack.c.bf16 %v45, %v44
    %v63 = vpack.c.bf16 %v47, %v46
    %v64 = vld [vmem:[%s1] sm:$0xff]
    %v65 = vld [vmem:[%s1 + $0x8] sm:$0xff]
    %v66 = vpack.c.bf16 %v64, %v64
    %v67 = vpack.c.bf16 %v65, %v65
    %v68 = vld [vmem:[%s2] sm:$0x3]
    %v70 = vlaneseq
    %v71 = vshrl.u32 %v70, 7
    %v72 = vsub.s32 0, %v71
    %v73 = vrot.slane %v68, %v72
    %v74 = vlaneseq
    %v75 = vshrl.u32 %v74, 7
    %v76 = vsub.s32 1, %v75
    %v77 = vrot.slane %v68, %v76
    %vm80 = vcmask 64512
    %v82 = vsel %vm80, %v48, 0
    %v85 = vsel %vm80, %v49, 0
    %v88 = vsel %vm80, %v50, 0
    %v91 = vsel %vm80, %v51, 0
    %v94 = vsel %vm80, %v52, 0
    %v97 = vsel %vm80, %v53, 0
    %v100 = vsel %vm80, %v54, 0
    %v103 = vsel %vm80, %v55, 0
    %v106 = vsel %vm80, %v56, 0
    %v109 = vsel %vm80, %v57, 0
    %v112 = vsel %vm80, %v58, 0
    %v115 = vsel %vm80, %v59, 0
    %v118 = vsel %vm80, %v60, 0
    %v121 = vsel %vm80, %v61, 0
    %v124 = vsel %vm80, %v62, 0
    %v127 = vsel %vm80, %v63, 0
    %vm129 = vcmask 1043456
    %v131 = vsel %vm129, %v66, 0
    %v134 = vsel %vm129, %v67, 0
    %136 = vmatprep.subr.bf16.mxu0 %v134
    %137 = vmatpush1.bf16.msra.mxu0 %v131
    %138 = vmatprep.subr.bf16.mxu0 0
    %139 = vmatpush1.bf16.msra.mxu0 0
    %140 = vmatprep.subr.bf16.mxu0 0
    %141 = vmatpush1.bf16.msra.mxu0 0
    %142 = vmatprep.subr.bf16.mxu0 0
    %143 = vmatpush1.bf16.msra.mxu0 0
    %144 = vmatprep.subr.bf16.mxu0 0
    %145 = vmatpush1.bf16.msra.mxu0 0
    %146 = vmatprep.subr.bf16.mxu0 0
    %147 = vmatpush1.bf16.msra.mxu0 0
    %148 = vmatprep.subr.bf16.mxu0 0
    %149 = vmatpush1.bf16.msra.mxu0 0
    %150 = vmatprep.subr.bf16.mxu0 0
    %151 = vmatpush1.bf16.msra.mxu0 0
    %152 = vmatprep.subr.bf16.mxu0 0
    %153 = vmatpush1.bf16.msra.mxu0 0
    %154 = vmatprep.subr.bf16.mxu0 0
    %155 = vmatpush1.bf16.msra.mxu0 0
    %156 = vmatprep.subr.bf16.mxu0 0
    %157 = vmatpush1.bf16.msra.mxu0 0
    %158 = vmatprep.subr.bf16.mxu0 0
    %159 = vmatpush1.bf16.msra.mxu0 0
    %160 = vmatprep.subr.bf16.mxu0 0
    %161 = vmatpush1.bf16.msra.mxu0 0
    %162 = vmatprep.subr.bf16.mxu0 0
    %163 = vmatpush1.bf16.msra.mxu0 0
    %164 = vmatprep.subr.bf16.mxu0 0
    %165 = vmatpush1.bf16.msra.mxu0 0
    %166 = vmatprep.subr.bf16.mxu0 0
    %167 = vmatpush1.bf16.msra.mxu0 0
    %168 = vmatprep.mubr.bf16.mxu0 0
    %169 = vmatmul.mubr.bf16.gmra.mrb[0].mxu0 %v82
    %v170 = vpop.f32.mrb[0].mxu0
    %v171 = vadd.f32 %v73, %v170
    %v172 = vpop.f32.mrb[0].mxu0
    %v173 = vadd.f32 %v77, %v172
    %v174 = vpop.f32.mrb[0].mxu0
    %v175 = vadd.f32 %v73, %v174
    %v176 = vpop.f32.mrb[0].mxu0
    %v177 = vadd.f32 %v77, %v176
    %178 = vmatprep.mubr.bf16.mxu0 0
    %179 = vmatmul.mubr.bf16.gmra.mrb[0].mxu0 %v85
    %v180 = vpop.f32.mrb[0].mxu0
    %v181 = vadd.f32 %v73, %v180
    %v182 = vpop.f32.mrb[0].mxu0
    %v183 = vadd.f32 %v77, %v182
    %v184 = vpop.f32.mrb[0].mxu0
    %v185 = vadd.f32 %v73, %v184
    %v186 = vpop.f32.mrb[0].mxu0
    %v187 = vadd.f32 %v77, %v186
    %188 = vmatprep.mubr.bf16.mxu0 0
    %189 = vmatmul.mubr.bf16.gmra.mrb[0].mxu0 %v88
    %v190 = vpop.f32.mrb[0].mxu0
    %v191 = vadd.f32 %v73, %v190
    %v192 = vpop.f32.mrb[0].mxu0
    %v193 = vadd.f32 %v77, %v192
    %v194 = vpop.f32.mrb[0].mxu0
    %v195 = vadd.f32 %v73, %v194
    %v196 = vpop.f32.mrb[0].mxu0
    %v197 = vadd.f32 %v77, %v196
    %198 = vmatprep.mubr.bf16.mxu0 0
    %199 = vmatmul.mubr.bf16.gmra.mrb[0].mxu0 %v91
    %v200 = vpop.f32.mrb[0].mxu0
    %v201 = vadd.f32 %v73, %v200
    %v202 = vpop.f32.mrb[0].mxu0
    %v203 = vadd.f32 %v77, %v202
    %v204 = vpop.f32.mrb[0].mxu0
    %v205 = vadd.f32 %v73, %v204
    %v206 = vpop.f32.mrb[0].mxu0
    %v207 = vadd.f32 %v77, %v206
    %208 = vmatprep.mubr.bf16.mxu0 0
    %209 = vmatmul.mubr.bf16.gmra.mrb[0].mxu0 %v94
    %v210 = vpop.f32.mrb[0].mxu0
    %v211 = vadd.f32 %v73, %v210
    %v212 = vpop.f32.mrb[0].mxu0
    %v213 = vadd.f32 %v77, %v212
    %v214 = vpop.f32.mrb[0].mxu0
    %v215 = vadd.f32 %v73, %v214
    %v216 = vpop.f32.mrb[0].mxu0
    %v217 = vadd.f32 %v77, %v216
    %218 = vmatprep.mubr.bf16.mxu0 0
    %219 = vmatmul.mubr.bf16.gmra.mrb[0].mxu0 %v97
    %v220 = vpop.f32.mrb[0].mxu0
    %v221 = vadd.f32 %v73, %v220
    %v222 = vpop.f32.mrb[0].mxu0
    %v223 = vadd.f32 %v77, %v222
    %v224 = vpop.f32.mrb[0].mxu0
    %v225 = vadd.f32 %v73, %v224
    %v226 = vpop.f32.mrb[0].mxu0
    %v227 = vadd.f32 %v77, %v226
    %228 = vmatprep.mubr.bf16.mxu0 0
    %229 = vmatmul.mubr.bf16.gmra.mrb[0].mxu0 %v100
    %v230 = vpop.f32.mrb[0].mxu0
    %v231 = vadd.f32 %v73, %v230
    %v232 = vpop.f32.mrb[0].mxu0
    %v233 = vadd.f32 %v77, %v232
    %v234 = vpop.f32.mrb[0].mxu0
    %v235 = vadd.f32 %v73, %v234
    %v236 = vpop.f32.mrb[0].mxu0
    %v237 = vadd.f32 %v77, %v236
    %238 = vmatprep.mubr.bf16.mxu0 0
    %239 = vmatmul.mubr.bf16.gmra.mrb[0].mxu0 %v103
    %v240 = vpop.f32.mrb[0].mxu0
    %v241 = vadd.f32 %v73, %v240
    %v242 = vpop.f32.mrb[0].mxu0
    %v243 = vadd.f32 %v77, %v242
    %v244 = vpop.f32.mrb[0].mxu0
    %v245 = vadd.f32 %v73, %v244
    %v246 = vpop.f32.mrb[0].mxu0
    %v247 = vadd.f32 %v77, %v246
    %248 = vmatprep.mubr.bf16.mxu0 0
    %249 = vmatmul.mubr.bf16.gmra.mrb[0].mxu0 %v106
    %v250 = vpop.f32.mrb[0].mxu0
    %v251 = vadd.f32 %v73, %v250
    %v252 = vpop.f32.mrb[0].mxu0
    %v253 = vadd.f32 %v77, %v252
    %v254 = vpop.f32.mrb[0].mxu0
    %v255 = vadd.f32 %v73, %v254
    %v256 = vpop.f32.mrb[0].mxu0
    %v257 = vadd.f32 %v77, %v256
    %258 = vmatprep.mubr.bf16.mxu0 0
    %259 = vmatmul.mubr.bf16.gmra.mrb[0].mxu0 %v109
    %v260 = vpop.f32.mrb[0].mxu0
    %v261 = vadd.f32 %v73, %v260
    %v262 = vpop.f32.mrb[0].mxu0
    %v263 = vadd.f32 %v77, %v262
    %v264 = vpop.f32.mrb[0].mxu0
    %v265 = vadd.f32 %v73, %v264
    %v266 = vpop.f32.mrb[0].mxu0
    %v267 = vadd.f32 %v77, %v266
    %268 = vmatprep.mubr.bf16.mxu0 0
    %269 = vmatmul.mubr.bf16.gmra.mrb[0].mxu0 %v112
    %v270 = vpop.f32.mrb[0].mxu0
    %v271 = vadd.f32 %v73, %v270
    %v272 = vpop.f32.mrb[0].mxu0
    %v273 = vadd.f32 %v77, %v272
    %v274 = vpop.f32.mrb[0].mxu0
    %v275 = vadd.f32 %v73, %v274
    %v276 = vpop.f32.mrb[0].mxu0
    %v277 = vadd.f32 %v77, %v276
    %278 = vmatprep.mubr.bf16.mxu0 0
    %279 = vmatmul.mubr.bf16.gmra.mrb[0].mxu0 %v115
    %v280 = vpop.f32.mrb[0].mxu0
    %v281 = vadd.f32 %v73, %v280
    %v282 = vpop.f32.mrb[0].mxu0
    %v283 = vadd.f32 %v77, %v282
    %v284 = vpop.f32.mrb[0].mxu0
    %v285 = vadd.f32 %v73, %v284
    %v286 = vpop.f32.mrb[0].mxu0
    %v287 = vadd.f32 %v77, %v286
    %288 = vmatprep.mubr.bf16.mxu0 0
    %289 = vmatmul.mubr.bf16.gmra.mrb[0].mxu0 %v118
    %v290 = vpop.f32.mrb[0].mxu0
    %v291 = vadd.f32 %v73, %v290
    %v292 = vpop.f32.mrb[0].mxu0
    %v293 = vadd.f32 %v77, %v292
    %v294 = vpop.f32.mrb[0].mxu0
    %v295 = vadd.f32 %v73, %v294
    %v296 = vpop.f32.mrb[0].mxu0
    %v297 = vadd.f32 %v77, %v296
    %298 = vmatprep.mubr.bf16.mxu0 0
    %299 = vmatmul.mubr.bf16.gmra.mrb[0].mxu0 %v121
    %v300 = vpop.f32.mrb[0].mxu0
    %v301 = vadd.f32 %v73, %v300
    %v302 = vpop.f32.mrb[0].mxu0
    %v303 = vadd.f32 %v77, %v302
    %v304 = vpop.f32.mrb[0].mxu0
    %v305 = vadd.f32 %v73, %v304
    %v306 = vpop.f32.mrb[0].mxu0
    %v307 = vadd.f32 %v77, %v306
    %308 = vmatprep.mubr.bf16.mxu0 0
    %309 = vmatmul.mubr.bf16.gmra.mrb[0].mxu0 %v124
    %v310 = vpop.f32.mrb[0].mxu0
    %v311 = vadd.f32 %v73, %v310
    %v312 = vpop.f32.mrb[0].mxu0
    %v313 = vadd.f32 %v77, %v312
    %v314 = vpop.f32.mrb[0].mxu0
    %v315 = vadd.f32 %v73, %v314
    %v316 = vpop.f32.mrb[0].mxu0
    %v317 = vadd.f32 %v77, %v316
    %318 = vmatprep.mubr.bf16.mxu0 0
    %319 = vmatmul.mubr.bf16.gmra.mrb[0].mxu0 %v127
    %v320 = vpop.f32.mrb[0].mxu0
    %v321 = vadd.f32 %v73, %v320
    %v322 = vpop.f32.mrb[0].mxu0
    %v323 = vadd.f32 %v77, %v322
    %v324 = vpop.f32.mrb[0].mxu0
    %v325 = vadd.f32 %v73, %v324
    %v326 = vpop.f32.mrb[0].mxu0
    %v327 = vadd.f32 %v77, %v326
    %328 = vdwg.mxu0
    %vm329 = vcmp.gt.f32.partialorder %v171, 0.0
    %vm330 = vcmp.gt.f32.partialorder %v173, 0.0
    %vm331 = vcmp.gt.f32.partialorder %v175, 0.0
    %vm332 = vcmp.gt.f32.partialorder %v177, 0.0
    %vm333 = vcmp.gt.f32.partialorder %v181, 0.0
    %vm334 = vcmp.gt.f32.partialorder %v183, 0.0
    %vm335 = vcmp.gt.f32.partialorder %v185, 0.0
    %vm336 = vcmp.gt.f32.partialorder %v187, 0.0
    %vm337 = vcmp.gt.f32.partialorder %v191, 0.0
    %vm338 = vcmp.gt.f32.partialorder %v193, 0.0
    %vm339 = vcmp.gt.f32.partialorder %v195, 0.0
    %vm340 = vcmp.gt.f32.partialorder %v197, 0.0
    %vm341 = vcmp.gt.f32.partialorder %v201, 0.0
    %vm342 = vcmp.gt.f32.partialorder %v203, 0.0
    %vm343 = vcmp.gt.f32.partialorder %v205, 0.0
    %vm344 = vcmp.gt.f32.partialorder %v207, 0.0
    %vm345 = vcmp.gt.f32.partialorder %v211, 0.0
    %vm346 = vcmp.gt.f32.partialorder %v213, 0.0
    %vm347 = vcmp.gt.f32.partialorder %v215, 0.0
    %vm348 = vcmp.gt.f32.partialorder %v217, 0.0
    %vm349 = vcmp.gt.f32.partialorder %v221, 0.0
    %vm350 = vcmp.gt.f32.partialorder %v223, 0.0
    %vm351 = vcmp.gt.f32.partialorder %v225, 0.0
    %vm352 = vcmp.gt.f32.partialorder %v227, 0.0
    %vm353 = vcmp.gt.f32.partialorder %v231, 0.0
    %vm354 = vcmp.gt.f32.partialorder %v233, 0.0
    %vm355 = vcmp.gt.f32.partialorder %v235, 0.0
    %vm356 = vcmp.gt.f32.partialorder %v237, 0.0
    %vm357 = vcmp.gt.f32.partialorder %v241, 0.0
    %vm358 = vcmp.gt.f32.partialorder %v243, 0.0
    %vm359 = vcmp.gt.f32.partialorder %v245, 0.0
    %vm360 = vcmp.gt.f32.partialorder %v247, 0.0
    %vm361 = vcmp.gt.f32.partialorder %v251, 0.0
    %vm362 = vcmp.gt.f32.partialorder %v253, 0.0
    %vm363 = vcmp.gt.f32.partialorder %v255, 0.0
    %vm364 = vcmp.gt.f32.partialorder %v257, 0.0
    %vm365 = vcmp.gt.f32.partialorder %v261, 0.0
    %vm366 = vcmp.gt.f32.partialorder %v263, 0.0
    %vm367 = vcmp.gt.f32.partialorder %v265, 0.0
    %vm368 = vcmp.gt.f32.partialorder %v267, 0.0
    %vm369 = vcmp.gt.f32.partialorder %v271, 0.0
    %vm370 = vcmp.gt.f32.partialorder %v273, 0.0
    %vm371 = vcmp.gt.f32.partialorder %v275, 0.0
    %vm372 = vcmp.gt.f32.partialorder %v277, 0.0
    %vm373 = vcmp.gt.f32.partialorder %v281, 0.0
    %vm374 = vcmp.gt.f32.partialorder %v283, 0.0
    %vm375 = vcmp.gt.f32.partialorder %v285, 0.0
    %vm376 = vcmp.gt.f32.partialorder %v287, 0.0
    %vm377 = vcmp.gt.f32.partialorder %v291, 0.0
    %vm378 = vcmp.gt.f32.partialorder %v293, 0.0
    %vm379 = vcmp.gt.f32.partialorder %v295, 0.0
    %vm380 = vcmp.gt.f32.partialorder %v297, 0.0
    %vm381 = vcmp.gt.f32.partialorder %v301, 0.0
    %vm382 = vcmp.gt.f32.partialorder %v303, 0.0
    %vm383 = vcmp.gt.f32.partialorder %v305, 0.0
    %vm384 = vcmp.gt.f32.partialorder %v307, 0.0
    %vm385 = vcmp.gt.f32.partialorder %v311, 0.0
    %vm386 = vcmp.gt.f32.partialorder %v313, 0.0
    %vm387 = vcmp.gt.f32.partialorder %v315, 0.0
    %vm388 = vcmp.gt.f32.partialorder %v317, 0.0
    %vm389 = vcmp.gt.f32.partialorder %v321, 0.0
    %vm390 = vcmp.gt.f32.partialorder %v323, 0.0
    %vm391 = vcmp.gt.f32.partialorder %v325, 0.0
    %vm392 = vcmp.gt.f32.partialorder %v327, 0.0
    %v393 = vmul.f32 %v171, 0.2
    %v394 = vmul.f32 %v173, 0.2
    %v395 = vmul.f32 %v175, 0.2
    %v396 = vmul.f32 %v177, 0.2
    %v397 = vmul.f32 %v181, 0.2
    %v398 = vmul.f32 %v183, 0.2
    %v399 = vmul.f32 %v185, 0.2
    %v400 = vmul.f32 %v187, 0.2
    %v401 = vmul.f32 %v191, 0.2
    %v402 = vmul.f32 %v193, 0.2
    %v403 = vmul.f32 %v195, 0.2
    %v404 = vmul.f32 %v197, 0.2
    %v405 = vmul.f32 %v201, 0.2
    %v406 = vmul.f32 %v203, 0.2
    %v407 = vmul.f32 %v205, 0.2
    %v408 = vmul.f32 %v207, 0.2
    %v409 = vmul.f32 %v211, 0.2
    %v410 = vmul.f32 %v213, 0.2
    %v411 = vmul.f32 %v215, 0.2
    %v412 = vmul.f32 %v217, 0.2
    %v413 = vmul.f32 %v221, 0.2
    %v414 = vmul.f32 %v223, 0.2
    %v415 = vmul.f32 %v225, 0.2
    %v416 = vmul.f32 %v227, 0.2
    %v417 = vmul.f32 %v231, 0.2
    %v418 = vmul.f32 %v233, 0.2
    %v419 = vmul.f32 %v235, 0.2
    %v420 = vmul.f32 %v237, 0.2
    %v421 = vmul.f32 %v241, 0.2
    %v422 = vmul.f32 %v243, 0.2
    %v423 = vmul.f32 %v245, 0.2
    %v424 = vmul.f32 %v247, 0.2
    %v425 = vmul.f32 %v251, 0.2
    %v426 = vmul.f32 %v253, 0.2
    %v427 = vmul.f32 %v255, 0.2
    %v428 = vmul.f32 %v257, 0.2
    %v429 = vmul.f32 %v261, 0.2
    %v430 = vmul.f32 %v263, 0.2
    %v431 = vmul.f32 %v265, 0.2
    %v432 = vmul.f32 %v267, 0.2
    %v433 = vmul.f32 %v271, 0.2
    %v434 = vmul.f32 %v273, 0.2
    %v435 = vmul.f32 %v275, 0.2
    %v436 = vmul.f32 %v277, 0.2
    %v437 = vmul.f32 %v281, 0.2
    %v438 = vmul.f32 %v283, 0.2
    %v439 = vmul.f32 %v285, 0.2
    %v440 = vmul.f32 %v287, 0.2
    %v441 = vmul.f32 %v291, 0.2
    %v442 = vmul.f32 %v293, 0.2
    %v443 = vmul.f32 %v295, 0.2
    %v444 = vmul.f32 %v297, 0.2
    %v445 = vmul.f32 %v301, 0.2
    %v446 = vmul.f32 %v303, 0.2
    %v447 = vmul.f32 %v305, 0.2
    %v448 = vmul.f32 %v307, 0.2
    %v449 = vmul.f32 %v311, 0.2
    %v450 = vmul.f32 %v313, 0.2
    %v451 = vmul.f32 %v315, 0.2
    %v452 = vmul.f32 %v317, 0.2
    %v453 = vmul.f32 %v321, 0.2
    %v454 = vmul.f32 %v323, 0.2
    %v455 = vmul.f32 %v325, 0.2
    %v456 = vmul.f32 %v327, 0.2
    %v457 = vsel %vm329, %v171, %v393
    %v458 = vsel %vm330, %v173, %v394
    %v459 = vsel %vm331, %v175, %v395
    %v460 = vsel %vm332, %v177, %v396
    %v461 = vsel %vm333, %v181, %v397
    %v462 = vsel %vm334, %v183, %v398
    %v463 = vsel %vm335, %v185, %v399
    %v464 = vsel %vm336, %v187, %v400
    %v465 = vsel %vm337, %v191, %v401
    %v466 = vsel %vm338, %v193, %v402
    %v467 = vsel %vm339, %v195, %v403
    %v468 = vsel %vm340, %v197, %v404
    %v469 = vsel %vm341, %v201, %v405
    %v470 = vsel %vm342, %v203, %v406
    %v471 = vsel %vm343, %v205, %v407
    %v472 = vsel %vm344, %v207, %v408
    %v473 = vsel %vm345, %v211, %v409
    %v474 = vsel %vm346, %v213, %v410
    %v475 = vsel %vm347, %v215, %v411
    %v476 = vsel %vm348, %v217, %v412
    %v477 = vsel %vm349, %v221, %v413
    %v478 = vsel %vm350, %v223, %v414
    %v479 = vsel %vm351, %v225, %v415
    %v480 = vsel %vm352, %v227, %v416
    %v481 = vsel %vm353, %v231, %v417
    %v482 = vsel %vm354, %v233, %v418
    %v483 = vsel %vm355, %v235, %v419
    %v484 = vsel %vm356, %v237, %v420
    %v485 = vsel %vm357, %v241, %v421
    %v486 = vsel %vm358, %v243, %v422
    %v487 = vsel %vm359, %v245, %v423
    %v488 = vsel %vm360, %v247, %v424
    %v489 = vsel %vm361, %v251, %v425
    %v490 = vsel %vm362, %v253, %v426
    %v491 = vsel %vm363, %v255, %v427
    %v492 = vsel %vm364, %v257, %v428
    %v493 = vsel %vm365, %v261, %v429
    %v494 = vsel %vm366, %v263, %v430
    %v495 = vsel %vm367, %v265, %v431
    %v496 = vsel %vm368, %v267, %v432
    %v497 = vsel %vm369, %v271, %v433
    %v498 = vsel %vm370, %v273, %v434
    %v499 = vsel %vm371, %v275, %v435
    %v500 = vsel %vm372, %v277, %v436
    %v501 = vsel %vm373, %v281, %v437
    %v502 = vsel %vm374, %v283, %v438
    %v503 = vsel %vm375, %v285, %v439
    %v504 = vsel %vm376, %v287, %v440
    %v505 = vsel %vm377, %v291, %v441
    %v506 = vsel %vm378, %v293, %v442
    %v507 = vsel %vm379, %v295, %v443
    %v508 = vsel %vm380, %v297, %v444
    %v509 = vsel %vm381, %v301, %v445
    %v510 = vsel %vm382, %v303, %v446
    %v511 = vsel %vm383, %v305, %v447
    %v512 = vsel %vm384, %v307, %v448
    %v513 = vsel %vm385, %v311, %v449
    %v514 = vsel %vm386, %v313, %v450
    %v515 = vsel %vm387, %v315, %v451
    %v516 = vsel %vm388, %v317, %v452
    %v517 = vsel %vm389, %v321, %v453
    %v518 = vsel %vm390, %v323, %v454
    %v519 = vsel %vm391, %v325, %v455
    %v520 = vsel %vm392, %v327, %v456
    %521 = vst [vmem:[#allocation2] sm:$0xff] %v457
    %522 = vst [vmem:[#allocation2 + $0x8] sm:$0xff] %v458
    %523 = vst [vmem:[#allocation2 + $0x10] sm:$0xff] %v459
    %524 = vst [vmem:[#allocation2 + $0x18] sm:$0xff] %v460
    %525 = vst [vmem:[#allocation2 + $0x20] sm:$0xff] %v461
    %526 = vst [vmem:[#allocation2 + $0x28] sm:$0xff] %v462
    %527 = vst [vmem:[#allocation2 + $0x30] sm:$0xff] %v463
    %528 = vst [vmem:[#allocation2 + $0x38] sm:$0xff] %v464
    %529 = vst [vmem:[#allocation2 + $0x40] sm:$0xff] %v465
    %530 = vst [vmem:[#allocation2 + $0x48] sm:$0xff] %v466
    %531 = vst [vmem:[#allocation2 + $0x50] sm:$0xff] %v467
    %532 = vst [vmem:[#allocation2 + $0x58] sm:$0xff] %v468
    %533 = vst [vmem:[#allocation2 + $0x60] sm:$0xff] %v469
    %534 = vst [vmem:[#allocation2 + $0x68] sm:$0xff] %v470
    %535 = vst [vmem:[#allocation2 + $0x70] sm:$0xff] %v471
    %536 = vst [vmem:[#allocation2 + $0x78] sm:$0xff] %v472
    %537 = vst [vmem:[#allocation2 + $0x80] sm:$0xff] %v473
    %538 = vst [vmem:[#allocation2 + $0x88] sm:$0xff] %v474
    %539 = vst [vmem:[#allocation2 + $0x90] sm:$0xff] %v475
    %540 = vst [vmem:[#allocation2 + $0x98] sm:$0xff] %v476
    %541 = vst [vmem:[#allocation2 + $0xa0] sm:$0xff] %v477
    %542 = vst [vmem:[#allocation2 + $0xa8] sm:$0xff] %v478
    %543 = vst [vmem:[#allocation2 + $0xb0] sm:$0xff] %v479
    %544 = vst [vmem:[#allocation2 + $0xb8] sm:$0xff] %v480
    %545 = vst [vmem:[#allocation2 + $0xc0] sm:$0xff] %v481
    %546 = vst [vmem:[#allocation2 + $0xc8] sm:$0xff] %v482
    %547 = vst [vmem:[#allocation2 + $0xd0] sm:$0xff] %v483
    %548 = vst [vmem:[#allocation2 + $0xd8] sm:$0xff] %v484
    %549 = vst [vmem:[#allocation2 + $0xe0] sm:$0xff] %v485
    %550 = vst [vmem:[#allocation2 + $0xe8] sm:$0xff] %v486
    %551 = vst [vmem:[#allocation2 + $0xf0] sm:$0xff] %v487
    %552 = vst [vmem:[#allocation2 + $0xf8] sm:$0xff] %v488
    %553 = vst [vmem:[#allocation2 + $0x100] sm:$0xff] %v489
    %554 = vst [vmem:[#allocation2 + $0x108] sm:$0xff] %v490
    %555 = vst [vmem:[#allocation2 + $0x110] sm:$0xff] %v491
    %556 = vst [vmem:[#allocation2 + $0x118] sm:$0xff] %v492
    %557 = vst [vmem:[#allocation2 + $0x120] sm:$0xff] %v493
    %558 = vst [vmem:[#allocation2 + $0x128] sm:$0xff] %v494
    %559 = vst [vmem:[#allocation2 + $0x130] sm:$0xff] %v495
    %560 = vst [vmem:[#allocation2 + $0x138] sm:$0xff] %v496
    %561 = vst [vmem:[#allocation2 + $0x140] sm:$0xff] %v497
    %562 = vst [vmem:[#allocation2 + $0x148] sm:$0xff] %v498
    %563 = vst [vmem:[#allocation2 + $0x150] sm:$0xff] %v499
    %564 = vst [vmem:[#allocation2 + $0x158] sm:$0xff] %v500
    %565 = vst [vmem:[#allocation2 + $0x160] sm:$0xff] %v501
    %566 = vst [vmem:[#allocation2 + $0x168] sm:$0xff] %v502
    %567 = vst [vmem:[#allocation2 + $0x170] sm:$0xff] %v503
    %568 = vst [vmem:[#allocation2 + $0x178] sm:$0xff] %v504
    %569 = vst [vmem:[#allocation2 + $0x180] sm:$0xff] %v505
    %570 = vst [vmem:[#allocation2 + $0x188] sm:$0xff] %v506
    %571 = vst [vmem:[#allocation2 + $0x190] sm:$0xff] %v507
    %572 = vst [vmem:[#allocation2 + $0x198] sm:$0xff] %v508
    %573 = vst [vmem:[#allocation2 + $0x1a0] sm:$0xff] %v509
    %574 = vst [vmem:[#allocation2 + $0x1a8] sm:$0xff] %v510
    %575 = vst [vmem:[#allocation2 + $0x1b0] sm:$0xff] %v511
    %576 = vst [vmem:[#allocation2 + $0x1b8] sm:$0xff] %v512
    %577 = vst [vmem:[#allocation2 + $0x1c0] sm:$0xff] %v513
    %578 = vst [vmem:[#allocation2 + $0x1c8] sm:$0xff] %v514
    %579 = vst [vmem:[#allocation2 + $0x1d0] sm:$0xff] %v515
    %580 = vst [vmem:[#allocation2 + $0x1d8] sm:$0xff] %v516
    %581 = vst [vmem:[#allocation2 + $0x1e0] sm:$0xff] %v517
    %582 = vst [vmem:[#allocation2 + $0x1e8] sm:$0xff] %v518
    %583 = vst [vmem:[#allocation2 + $0x1f0] sm:$0xff] %v519
    %584 = vst [vmem:[#allocation2 + $0x1f8] sm:$0xff] %v520
    // Predicated region
    $region14: #{tpu_custom_call.1} parent=1 // pred_check
      _
    $region15: #{tpu_custom_call.1} parent=1 // pred_check_branch
      %586 = sbr.rel (0) target = $region17
    $region16: #{tpu_custom_call.1} parent=1 // pred_region
      %s588 = ssub.s32 8192, 8192
      %589 = vsyncadd [#allocation3], %s588
      %s590 = sshll.u32 [#allocation2], 4
      %s591 = int_to_ptr.vmem [resolvable:$true] %s590
      %596 = dma.vmem_to_hbm [thread:$0]  %s591, 8192, %s3, [#allocation3], 256, 256, 16
    $region17: #{tpu_custom_call.1} parent=1 // pred_fallthru
      _
    // Predicated region
    $region18: #{tpu_custom_call.1} parent=1 // pred_check
      _
    $region19: #{tpu_custom_call.1} parent=1 // pred_check_branch
      %598 = sbr.rel (0) target = $region21
    $region20: #{tpu_custom_call.1} parent=1 // pred_region
      %599 = dma.done [#allocation3], 8192
    $region21: #{tpu_custom_call.1} parent=1 // pred_fallthru
      _
    %600 = vsyncpa [#allocation3], 1

</llo_original>
